<compile_context>
chip_gen: v5e
topology: v5e:2x2
jax: 0.10.0
libtpu: 0.0.40
codegen_flags: <defaults>
</compile_context>

<pallas_src>
import jax
import jax.numpy as jnp
from jax.experimental import pallas as pl
from jax.experimental.pallas import tpu as pltpu


def _compress_in_kernel(w_ref, x_ref, b_ref, a_ref, o_ref):
    # w_ref: (Cout, Cin) f32   x_ref: (Cin, THW) f32 (native HBM dtype)
    # b_ref: (Cout, 1)  f32    a_ref: (Cout, 1)  f32 (per-channel PReLU slope)
    # o_ref: (Cout, THW) bf16
    # Cast to bf16 on the VPU (hidden under the DMA), accumulate in f32 on MXU.
    x = x_ref[...].astype(jnp.bfloat16)
    w = w_ref[...].astype(jnp.bfloat16)
    y = jnp.dot(w, x, preferred_element_type=jnp.float32)
    y = y + b_ref[...]                                   # bias broadcast over lanes
    a = a_ref[...]
    o_ref[...] = jnp.where(y >= 0.0, y, a * y).astype(o_ref.dtype)


def compress_in_pallas(x_nchw, w, b, alpha, *,
                       tile_hw_cap=16384, out_dtype=jnp.bfloat16):
    """1x1 conv (Cin->Cout) + PReLU, NCHW-native per-batch matmul on the MXU.

    x_nchw: (N, Cin, H, W)            float32 (or bf16) as produced upstream
    w:      (Cout, Cin)               float32  (== PyTorch conv weight (Cout,Cin,1,1))
    b:      (Cout,)                   float32
    alpha:  scalar, (1,) or (Cout,)   float32  PReLU slope(s)
    returns (N, Cout, H, W)           out_dtype (bf16 by default)
    """
    N, Cin, H, W = x_nchw.shape
    Cout = w.shape[0]
    HW = H * W
    LANE = 128

    # --- spatial tiling ------------------------------------------------------
    # tile_hw: multiple of 128, capped for VMEM. No explicit pad: Pallas masks
    # the partial edge block (grid uses cdiv).
    hw_lane = pl.cdiv(HW, LANE) * LANE
    tile_hw = min(hw_lane, tile_hw_cap)
    n_hw_tiles = pl.cdiv(HW, tile_hw)
    # Guarantee >= 2 grid steps where possible so v7x megacore shards across
    # both TensorCores (and v5e/v6e pipelining overlaps at least one tile).
    if N * n_hw_tiles < 2 and tile_hw > LANE:
        tile_hw = pl.cdiv(tile_hw // 2, LANE) * LANE
        n_hw_tiles = pl.cdiv(HW, tile_hw)

    # --- VMEM budget (bytes), explicit so larger caps never hit the scoped
    #     default (16 MiB on v5e, 32 MiB on v6e/v7x). ------------------------
    x_bytes = 2 * Cin * tile_hw * x_nchw.dtype.itemsize      # double-buffered input
    o_bytes = 2 * Cout * tile_hw * jnp.dtype(out_dtype).itemsize  # double-buffered out
    tmp_bytes = 2 * Cout * tile_hw * 4                       # f32 dot result + epilogue
    vmem_limit_bytes = int(min(max(x_bytes + o_bytes + tmp_bytes + (2 << 20),
                                   16 << 20),
                               48 << 20))                    # stay under v7x 64 MiB phys

    x = x_nchw.reshape(N, Cin, HW)           # contiguous NCHW -> free bitcast reshape
    b2d = b.astype(jnp.float32).reshape(Cout, 1)
    a_vec = jnp.broadcast_to(
        jnp.asarray(alpha, jnp.float32).reshape(-1), (Cout,))
    a2d = a_vec.reshape(Cout, 1)
    w_f32 = w.astype(jnp.float32)

    out_flat = pl.pallas_call(
        _compress_in_kernel,
        out_shape=jax.ShapeDtypeStruct((N, Cout, HW), out_dtype),
        grid=(N, n_hw_tiles),
        in_specs=[
            pl.BlockSpec((Cout, Cin), lambda n, t: (0, 0)),              # W
            pl.BlockSpec((None, Cin, tile_hw), lambda n, t: (n, 0, t)),  # x[n]
            pl.BlockSpec((Cout, 1), lambda n, t: (0, 0)),                # bias
            pl.BlockSpec((Cout, 1), lambda n, t: (0, 0)),                # alpha
        ],
        out_specs=pl.BlockSpec((None, Cout, tile_hw), lambda n, t: (n, 0, t)),
        compiler_params=pltpu.CompilerParams(
            dimension_semantics=("parallel", "parallel"),
            vmem_limit_bytes=vmem_limit_bytes),
    )(w_f32, x, b2d, a2d)

    return out_flat.reshape(N, Cout, H, W)


def feedback_block_forward(x_nchw, params):
    """FeedbackBlock.forward.

    x = compress_in(x)            -> Pallas kernel
    output = swinir(x) + x        -> TODO(synk): swinir (G_two) undefined in source; omitted
    """
    x = compress_in_pallas(
        x_nchw, params["w_compress"], params["b_compress"], params["prelu_alpha"]
    )
    output = x  # TODO(synk): add self.swinir(x) once the G_two definition is available
    return output


def _reference_compress_in(x_nchw, w, b, alpha):
    # Pure-JAX reference matching the kernel's bf16-compute / f32-accumulate path.
    Cout = w.shape[0]
    xf = x_nchw.astype(jnp.bfloat16).astype(jnp.float32)
    wf = w.astype(jnp.bfloat16).astype(jnp.float32)
    y = jnp.einsum("oc,nchw->nohw", wf, xf,
                   preferred_element_type=jnp.float32)
    y = y + b[None, :, None, None]
    a = jnp.broadcast_to(jnp.asarray(alpha, jnp.float32).reshape(-1), (Cout,))
    return jnp.where(y >= 0.0, y, a[None, :, None, None] * y)


if __name__ == "__main__":
    key = jax.random.PRNGKey(0)
    num_features = 32
    N, H, W = 2, 16, 16
    Cin, Cout = 2 * num_features, num_features

    k_x, k_w, k_b, k_a = jax.random.split(key, 4)
    x = jax.random.normal(k_x, (N, Cin, H, W), dtype=jnp.float32)

    # Deterministic synthetic parameters (compress_in conv weight/bias,
    # per-channel PReLU slopes as in SRFBN's ConvBlock).
    w_compress = (jax.random.normal(k_w, (Cout, Cin), dtype=jnp.float32)
                  * (1.0 / jnp.sqrt(Cin)))
    b_compress = jax.random.normal(k_b, (Cout,), dtype=jnp.float32) * 0.01
    prelu_alpha = 0.25 + 0.05 * jax.random.normal(k_a, (Cout,), dtype=jnp.float32)

    params = dict(w_compress=w_compress, b_compress=b_compress,
                  prelu_alpha=prelu_alpha)

    out = feedback_block_forward(x, params)
    out = jax.block_until_ready(out)

    ref = _reference_compress_in(x, w_compress, b_compress, prelu_alpha)
    assert out.shape == (N, Cout, H, W)
    assert out.dtype == jnp.bfloat16
    # bf16 output store -> modest tolerance vs. f32 reference.
    err = jnp.max(jnp.abs(out.astype(jnp.float32) - ref))
    assert jnp.allclose(out.astype(jnp.float32), ref, atol=5e-2, rtol=5e-2), float(err)

    print("KERNEL_OK")
</pallas_src>

<mosaic_0001>
module attributes {stable_mosaic.version = 11 : i64} {
  func.func @_compress_in_kernel(%arg0: i32, %arg1: i32, %arg2: memref<32x64xf32, #tpu.memory_space<vmem>>, %arg3: memref<1x64x256xf32, #tpu.memory_space<vmem>>, %arg4: memref<32x1xf32, #tpu.memory_space<vmem>>, %arg5: memref<32x1xf32, #tpu.memory_space<vmem>>, %arg6: memref<1x32x256xbf16, #tpu.memory_space<vmem>>) attributes {dimension_semantics = [#tpu.dimension_semantics<parallel>, #tpu.dimension_semantics<parallel>], iteration_bounds = array<i64: 2, 1>, scalar_prefetch = 0 : i64, scratch_operands = 0 : i64, tpu.core_type = #tpu.core_type<tc>, window_params = [{pipeline_mode = #tpu.pipeline_mode<synchronous>, transform_indices = @transform_0, window_bounds = array<i64: 32, 64>}, {transform_indices = @transform_1, window_bounds = array<i64: 1, 64, 256>}, {pipeline_mode = #tpu.pipeline_mode<synchronous>, transform_indices = @transform_2, window_bounds = array<i64: 32, 1>}, {pipeline_mode = #tpu.pipeline_mode<synchronous>, transform_indices = @transform_3, window_bounds = array<i64: 32, 1>}, {transform_indices = @transform_4, window_bounds = array<i64: 1, 32, 256>}]} {
    %c0 = arith.constant 0 : index
    %c0_0 = arith.constant 0 : index
    %c0_1 = arith.constant 0 : index
    %0 = vector.load %arg3[%c0, %c0_0, %c0_1] : memref<1x64x256xf32, #tpu.memory_space<vmem>>, vector<1x64x256xf32>
    %1 = vector.shape_cast %0 : vector<1x64x256xf32> to vector<64x256xf32>
    %2 = arith.truncf %1 : vector<64x256xf32> to vector<64x256xbf16>
    %c0_2 = arith.constant 0 : index
    %c0_3 = arith.constant 0 : index
    %3 = vector.load %arg2[%c0_2, %c0_3] : memref<32x64xf32, #tpu.memory_space<vmem>>, vector<32x64xf32>
    %4 = arith.truncf %3 : vector<32x64xf32> to vector<32x64xbf16>
    %cst = arith.constant dense<0.000000e+00> : vector<32x256xf32>
    %5 = tpu.matmul %4, %2, %cst {dimension_numbers = #tpu.dot_dimension_numbers<[1], [0], [0], [1], [0, 0, 1, 1], [], []>} : vector<32x64xbf16>, vector<64x256xbf16>, vector<32x256xf32> -> vector<32x256xf32>
    %c0_4 = arith.constant 0 : index
    %c0_5 = arith.constant 0 : index
    %6 = vector.load %arg4[%c0_4, %c0_5] : memref<32x1xf32, #tpu.memory_space<vmem>>, vector<32x1xf32>
    %7 = vector.broadcast %6 : vector<32x1xf32> to vector<32x256xf32>
    %8 = arith.addf %5, %7 : vector<32x256xf32>
    %c0_6 = arith.constant 0 : index
    %c0_7 = arith.constant 0 : index
    %9 = vector.load %arg5[%c0_6, %c0_7] : memref<32x1xf32, #tpu.memory_space<vmem>>, vector<32x1xf32>
    %cst_8 = arith.constant 0.000000e+00 : f32
    %10 = vector.broadcast %cst_8 : f32 to vector<32x256xf32>
    %11 = arith.cmpf oge, %8, %10 : vector<32x256xf32>
    %12 = vector.broadcast %9 : vector<32x1xf32> to vector<32x256xf32>
    %13 = arith.mulf %12, %8 : vector<32x256xf32>
    %14 = arith.select %11, %8, %13 : vector<32x256xi1>, vector<32x256xf32>
    %15 = arith.truncf %14 : vector<32x256xf32> to vector<32x256xbf16>
    %c0_9 = arith.constant 0 : index
    %c0_10 = arith.constant 0 : index
    %c0_11 = arith.constant 0 : index
    %16 = vector.load %arg6[%c0_9, %c0_10, %c0_11] : memref<1x32x256xbf16, #tpu.memory_space<vmem>>, vector<1x32x256xbf16>
    %17 = vector.shape_cast %16 : vector<1x32x256xbf16> to vector<32x256xbf16>
    %18 = vector.shape_cast %15 : vector<32x256xbf16> to vector<1x32x256xbf16>
    tpu.vector_store %arg6[%c0_9, %c0_10, %c0_11], %18 {strides = array<i32>} : memref<1x32x256xbf16, #tpu.memory_space<vmem>>, vector<1x32x256xbf16>,
    return
  }
  func.func @transform_0(%arg0: i32, %arg1: i32) -> (i32, i32) {
    %c0_i32 = arith.constant 0 : i32
    %c0_i32_0 = arith.constant 0 : i32
    %c0_i32_1 = arith.constant 0 : i32
    return %c0_i32, %c0_i32_0 : i32, i32
  }
  func.func @transform_1(%arg0: i32, %arg1: i32) -> (i32, i32, i32) {
    %c0_i32 = arith.constant 0 : i32
    %c0_i32_0 = arith.constant 0 : i32
    return %arg0, %c0_i32, %arg1 : i32, i32, i32
  }
  func.func @transform_2(%arg0: i32, %arg1: i32) -> (i32, i32) {
    %c0_i32 = arith.constant 0 : i32
    %c0_i32_0 = arith.constant 0 : i32
    %c0_i32_1 = arith.constant 0 : i32
    return %c0_i32, %c0_i32_0 : i32, i32
  }
  func.func @transform_3(%arg0: i32, %arg1: i32) -> (i32, i32) {
    %c0_i32 = arith.constant 0 : i32
    %c0_i32_0 = arith.constant 0 : i32
    %c0_i32_1 = arith.constant 0 : i32
    return %c0_i32, %c0_i32_0 : i32, i32
  }
  func.func @transform_4(%arg0: i32, %arg1: i32) -> (i32, i32, i32) {
    %c0_i32 = arith.constant 0 : i32
    %c0_i32_0 = arith.constant 0 : i32
    return %arg0, %c0_i32, %arg1 : i32, i32, i32
  }
}

</mosaic_0001>

<llo_original>
// kernel: tpu_custom_call.1
$region0: #{tpu_custom_call.1}
  #allocation0 [shape = 'u32[]', space=smem, size = 0x4, offset = 0x4, fixed_abs, tag = 'smem constant byte address 0x4 - core index']
  #allocation1 [shape = 'u32[72,128]{1,0:T(1,128)}', space=vmem, size = 0x9000, scoped, tag = 'internal scratch']
  %s0 = inlined_call_operand.vmem [shape: f32[32,64], index: 0, kind: input, shape index: {}]
  %s1 = inlined_call_operand.hbm [shape: f32[2,64,256], index: 1, kind: input, shape index: {}]
  %s2 = inlined_call_operand.vmem [shape: f32[32,1], index: 2, kind: input, shape index: {}]
  %s3 = inlined_call_operand.vmem [shape: f32[32,1], index: 3, kind: input, shape index: {}]
  %s4 = inlined_call_operand.hbm [shape: bf16[2,32,256], index: 4, kind: output, shape index: {}]
  %s5 = sld [smem:[#allocation0]]
  $region53: #{tpu_custom_call.1} parent=0
    _
  %s7 = ssub.s32 1, %s5
  %s8 = scalar_select 0, %s7, %s5
  $region1: #{tpu_custom_call.1} parent=0
    #allocation2 [shape = 'u8[131072]{0}', space=vmem, size = 0x20000, scoped, tag = 'input window, operand 1']
    #allocation3 [shape = 's32[2]{0}', space=sflag, size = 0x8, scoped, tag = 'scoped memory for tpu_custom_call.1']
    #allocation4 [shape = 's32[2]{0}', space=sflag, size = 0x8, scoped, tag = 'scoped memory for tpu_custom_call.1']
    #allocation5 [shape = 'u8[32768]{0}', space=vmem, size = 0x8000, scoped, tag = 'output window, operand 0']
    %9 = vsyncpa [#allocation3], 0
    %s10 = scalar_lea.sflag [#allocation3], 1
    %11 = vsyncpa %s10, 0
    %12 = vsyncpa [#allocation4], 0
    %s13 = scalar_lea.sflag [#allocation4], 1
    %14 = vsyncpa %s13, 0
    loop: start=0, step=1, limit=4
    $region2: #{tpu_custom_call.1} parent=1 // loop_pre_header
      _
    $region3: #{tpu_custom_call.1} parent=1 // loop_header
      %s16 = sphi 0, %s20
      %p17 = scmp.ge.s32.totalorder %s16, 4
      %s23 = sphi 0, %s35
      %s24 = sphi 0, %s31
      %s25 = sphi 0, %s23
      %s26 = sphi 0, %s24
      %s27 = sphi 0, %s25
      %s28 = sphi 0, %s26
      %s36 = sphi 0, %s36
      %s38 = sphi 0, %s36
      %s39 = sphi 0, %s38
      %s53 = sphi 0, %s39
      %s61 = sphi 0, %s63
      %s64 = sphi 0, %s61
      %s65 = sphi 0, %s64
      %s81 = sphi 0, %s65
      %s85 = sphi 0, %s85
      %s87 = sphi 0, %s85
      %s88 = sphi 0, %s87
      %s102 = sphi 0, %s88
      %s106 = sphi 0, %s106
      %s108 = sphi 0, %s106
      %s109 = sphi 0, %s108
      %s123 = sphi 0, %s109
      %s131 = sphi 0, %s133
      %s134 = sphi 0, %s131
      %s135 = sphi 0, %s134
      %s151 = sphi 0, %s135
    $region4: #{tpu_custom_call.1} parent=1 // loop_header_branch
      %19 = sbr.rel (%p17) target = $region8
    $region5: #{tpu_custom_call.1} parent=1 // loop_body
      %s21 = ssub.s32 %s16, 1
      %s22 = ssub.s32 %s16, 2
      %s29 = sadd.s32 1, %s24
      %p30 = scmp.ge.s32.totalorder %s29, 1
      %s31 = scalar_select %p30, 0, %s29
      %s32 = sadd.s32 1, %s23
      %s33 = scalar_select %p30, %s32, %s23
      %p34 = scmp.ge.s32.totalorder %s33, 2
      %s35 = scalar_select %p34, 0, %s33
      %s37 = sadd.s32 %s36, 1
      %p40 = scmp.eq.s32.totalorder %s16, 1
      %p41 = scmp.ne.s32.totalorder %s36, %s38
      %p42 = scmp.eq.s32.totalorder %s16, 0
      %p43 = por %p41, %p42
      %p44 = scmp.ne.s32.totalorder %s36, %s38
      %p45 = scmp.eq.s32.totalorder %s21, 1
      %p46 = por %p44, %p45
      %p47 = scmp.ne.s32.totalorder %s38, %s39
      %p48 = scmp.eq.s32.totalorder %s21, 0
      %p49 = por %p47, %p48
      %p50 = scmp.ne.s32.totalorder %s38, %s39
      %p51 = scmp.eq.s32.totalorder %s22, 1
      %p52 = por %p50, %p51
      %p54 = scmp.ne.s32.totalorder %s39, %s53
      %p55 = scmp.eq.s32.totalorder %s22, 0
      %p56 = por %p54, %p55
      %s57 = ssub.s32 %s23, %s35
      %s58 = ssub.s32 %s24, %s31
      %s59 = sor.u32 %s57, %s58
      %p60 = scmp.eq.s32.totalorder %s59, 0
      %s62 = sadd.s32 %s61, 1
      %s63 = scalar_select %p60, %s61, %s62
      %p66 = pneg %p60
      %p67 = scmp.eq.s32.totalorder %s16, 1
      %p68 = por %p66, %p67
      %p69 = scmp.ne.s32.totalorder %s61, %s64
      %p70 = scmp.eq.s32.totalorder %s16, 0
      %p71 = por %p69, %p70
      %p72 = scmp.ne.s32.totalorder %s61, %s64
      %p73 = scmp.eq.s32.totalorder %s21, 1
      %p74 = por %p72, %p73
      %p75 = scmp.ne.s32.totalorder %s64, %s65
      %p76 = scmp.eq.s32.totalorder %s21, 0
      %p77 = por %p75, %p76
      %p78 = scmp.ne.s32.totalorder %s64, %s65
      %p79 = scmp.eq.s32.totalorder %s22, 1
      %p80 = por %p78, %p79
      %p82 = scmp.ne.s32.totalorder %s65, %s81
      %p83 = scmp.eq.s32.totalorder %s22, 0
      %p84 = por %p82, %p83
      %s86 = sadd.s32 %s85, 1
      %p89 = scmp.eq.s32.totalorder %s16, 1
      %p90 = scmp.ne.s32.totalorder %s85, %s87
      %p91 = scmp.eq.s32.totalorder %s16, 0
      %p92 = por %p90, %p91
      %p93 = scmp.ne.s32.totalorder %s85, %s87
      %p94 = scmp.eq.s32.totalorder %s21, 1
      %p95 = por %p93, %p94
      %p96 = scmp.ne.s32.totalorder %s87, %s88
      %p97 = scmp.eq.s32.totalorder %s21, 0
      %p98 = por %p96, %p97
      %p99 = scmp.ne.s32.totalorder %s87, %s88
      %p100 = scmp.eq.s32.totalorder %s22, 1
      %p101 = por %p99, %p100
      %p103 = scmp.ne.s32.totalorder %s88, %s102
      %p104 = scmp.eq.s32.totalorder %s22, 0
      %p105 = por %p103, %p104
      %s107 = sadd.s32 %s106, 1
      %p110 = scmp.eq.s32.totalorder %s16, 1
      %p111 = scmp.ne.s32.totalorder %s106, %s108
      %p112 = scmp.eq.s32.totalorder %s16, 0
      %p113 = por %p111, %p112
      %p114 = scmp.ne.s32.totalorder %s106, %s108
      %p115 = scmp.eq.s32.totalorder %s21, 1
      %p116 = por %p114, %p115
      %p117 = scmp.ne.s32.totalorder %s108, %s109
      %p118 = scmp.eq.s32.totalorder %s21, 0
      %p119 = por %p117, %p118
      %p120 = scmp.ne.s32.totalorder %s108, %s109
      %p121 = scmp.eq.s32.totalorder %s22, 1
      %p122 = por %p120, %p121
      %p124 = scmp.ne.s32.totalorder %s109, %s123
      %p125 = scmp.eq.s32.totalorder %s22, 0
      %p126 = por %p124, %p125
      %s127 = ssub.s32 %s23, %s35
      %s128 = ssub.s32 %s24, %s31
      %s129 = sor.u32 %s127, %s128
      %p130 = scmp.eq.s32.totalorder %s129, 0
      %s132 = sadd.s32 %s131, 1
      %s133 = scalar_select %p130, %s131, %s132
      %p136 = pneg %p130
      %p137 = scmp.eq.s32.totalorder %s16, 1
      %p138 = por %p136, %p137
      %p139 = scmp.ne.s32.totalorder %s131, %s134
      %p140 = scmp.eq.s32.totalorder %s16, 0
      %p141 = por %p139, %p140
      %p142 = scmp.ne.s32.totalorder %s131, %s134
      %p143 = scmp.eq.s32.totalorder %s21, 1
      %p144 = por %p142, %p143
      %p145 = scmp.ne.s32.totalorder %s134, %s135
      %p146 = scmp.eq.s32.totalorder %s21, 0
      %p147 = por %p145, %p146
      %p148 = scmp.ne.s32.totalorder %s134, %s135
      %p149 = scmp.eq.s32.totalorder %s22, 1
      %p150 = por %p148, %p149
      %p152 = scmp.ne.s32.totalorder %s135, %s151
      %p153 = scmp.eq.s32.totalorder %s22, 0
      %p154 = por %p152, %p153
      %p155 = scmp.le.s32.totalorder 1, %s16
      %p156 = scmp.lt.s32.totalorder %s16, 3
      %p157 = pnand %p155, %p156
      %p158 = pneg %p157
      // Predicated region
      $region9: #{tpu_custom_call.1} parent=5 // pred_check
        _
      $region10: #{tpu_custom_call.1} parent=5 // pred_check_branch
        %160 = sbr.rel (%p157) target = $region12
      $region11: #{tpu_custom_call.1} parent=5 // pred_region
        %s161 = ssub.s32 %s16, 1
        // Predicated region
        $region13: #{tpu_custom_call.1} parent=11 // pred_check
          %p162 = pneg %p49
        $region14: #{tpu_custom_call.1} parent=11 // pred_check_branch
          %164 = sbr.rel (%p162) target = $region16
        $region15: #{tpu_custom_call.1} parent=11 // pred_region
          _
        $region16: #{tpu_custom_call.1} parent=11 // pred_fallthru
          _
        // Predicated region
        $region17: #{tpu_custom_call.1} parent=11 // pred_check
          %p165 = pneg %p98
        $region18: #{tpu_custom_call.1} parent=11 // pred_check_branch
          %167 = sbr.rel (%p165) target = $region20
        $region19: #{tpu_custom_call.1} parent=11 // pred_region
          _
        $region20: #{tpu_custom_call.1} parent=11 // pred_fallthru
          _
        // Predicated region
        $region21: #{tpu_custom_call.1} parent=11 // pred_check
          %p168 = pneg %p119
        $region22: #{tpu_custom_call.1} parent=11 // pred_check_branch
          %170 = sbr.rel (%p168) target = $region24
        $region23: #{tpu_custom_call.1} parent=11 // pred_region
          _
        $region24: #{tpu_custom_call.1} parent=11 // pred_fallthru
          _
      $region12: #{tpu_custom_call.1} parent=5 // pred_fallthru
        _
      %p171 = scmp.lt.s32.totalorder %s16, 2
      // Predicated region
      $region25: #{tpu_custom_call.1} parent=5 // pred_check
        %p172 = pneg %p171
      $region26: #{tpu_custom_call.1} parent=5 // pred_check_branch
        %174 = sbr.rel (%p172) target = $region28
      $region27: #{tpu_custom_call.1} parent=5 // pred_region
        // Predicated region
        $region29: #{tpu_custom_call.1} parent=27 // pred_check
          %p175 = pneg %p71
        $region30: #{tpu_custom_call.1} parent=27 // pred_check_branch
          %177 = sbr.rel (%p175) target = $region32
        $region31: #{tpu_custom_call.1} parent=27 // pred_region
          %s178 = sand.u32 %s61, 1
          %s179 = scalar_lea.sflag [#allocation3], %s178
          %s180 = sand.u32 %s61, 1
          %s181 = smul.addr %s180, 128
          %s182 = scalar_lea.vmem [#allocation2], %s181
          %s183 = smul.u32 2, %s24
          %185 = vsyncadd %s179, 0
          %s186 = smul.addr %s23, 16
          %s187 = sadd.s32 %s183, %s186
          %s188 = smul.addr %s187, 8
          %s189 = scalar_lea.hbm %s1, %s188
          %s190 = sshll.u32 %s189, 4
          %s191 = int_to_ptr.hbm [resolvable:$true] %s190
          %s192 = sshll.u32 %s182, 4
          %s193 = int_to_ptr.vmem [resolvable:$true] %s192
          %198 = dma.hbm_to_vmem [thread:$0]  %s191, 2048, %s193, %s179, 256, 256, 16
        $region32: #{tpu_custom_call.1} parent=27 // pred_fallthru
          _
      $region28: #{tpu_custom_call.1} parent=5 // pred_fallthru
        _
      %p199 = scmp.le.s32.totalorder 1, %s16
      %p200 = scmp.lt.s32.totalorder %s16, 3
      %p201 = pnand %p199, %p200
      %p202 = pneg %p201
      // Predicated region
      $region33: #{tpu_custom_call.1} parent=5 // pred_check
        _
      $region34: #{tpu_custom_call.1} parent=5 // pred_check_branch
        %204 = sbr.rel (%p201) target = $region36
      $region35: #{tpu_custom_call.1} parent=5 // pred_region
        %s205 = ssub.s32 %s16, 1
        %s206 = sand.u32 %s64, 1
        %s207 = scalar_lea.sflag [#allocation3], %s206
        %s208 = sand.u32 %s64, 1
        %s209 = smul.addr %s208, 128
        %s210 = scalar_lea.vmem [#allocation2], %s209
        // Predicated region
        $region37: #{tpu_custom_call.1} parent=35 // pred_check
          %p211 = pneg %p77
        $region38: #{tpu_custom_call.1} parent=35 // pred_check_branch
          %213 = sbr.rel (%p211) target = $region40
        $region39: #{tpu_custom_call.1} parent=35 // pred_region
          %215 = dma.done %s207, 2048
        $region40: #{tpu_custom_call.1} parent=35 // pred_fallthru
          _
        %p216 = pneg %p49
        %p217 = pneg %p46
        %s218 = sand.u32 %s64, 1
        %s219 = scalar_lea.sflag [#allocation3], %s218
        %s220 = sand.u32 %s64, 1
        %s221 = smul.addr %s220, 128
        %s222 = scalar_lea.vmem [#allocation2], %s221
        %p223 = pneg %p77
        %p224 = pneg %p74
        %p225 = pneg %p98
        %p226 = pneg %p95
        %p227 = pneg %p119
        %p228 = pneg %p116
        %p229 = pneg %p147
        %p230 = pneg %p144
        %s231 = sand.u32 %s134, 1
        %s232 = scalar_lea.sflag [#allocation4], %s231
        %s233 = sand.u32 %s134, 1
        %s234 = smul.addr %s233, 32
        %s235 = scalar_lea.vmem [#allocation5], %s234
        %s236 = smul.u32 2, %s26
        %s237 = smul.u32 2, %s26
        %v239 = vld [vmem:[%s210] sm:$0xff]
        %v240 = vld [vmem:[%s210 + $0x8] sm:$0xff]
        %v241 = vld [vmem:[%s210 + $0x10] sm:$0xff]
        %v242 = vld [vmem:[%s210 + $0x18] sm:$0xff]
        %v243 = vld [vmem:[%s210 + $0x20] sm:$0xff]
        %v244 = vld [vmem:[%s210 + $0x28] sm:$0xff]
        %v245 = vld [vmem:[%s210 + $0x30] sm:$0xff]
        %v246 = vld [vmem:[%s210 + $0x38] sm:$0xff]
        %v247 = vld [vmem:[%s210 + $0x40] sm:$0xff]
        %v248 = vld [vmem:[%s210 + $0x48] sm:$0xff]
        %v249 = vld [vmem:[%s210 + $0x50] sm:$0xff]
        %v250 = vld [vmem:[%s210 + $0x58] sm:$0xff]
        %v251 = vld [vmem:[%s210 + $0x60] sm:$0xff]
        %v252 = vld [vmem:[%s210 + $0x68] sm:$0xff]
        %v253 = vld [vmem:[%s210 + $0x70] sm:$0xff]
        %v254 = vld [vmem:[%s210 + $0x78] sm:$0xff]
        %v255 = vpack.c.bf16 %v241, %v239
        %v256 = vpack.c.bf16 %v242, %v240
        %v257 = vpack.c.bf16 %v245, %v243
        %v258 = vpack.c.bf16 %v246, %v244
        %v259 = vpack.c.bf16 %v249, %v247
        %v260 = vpack.c.bf16 %v250, %v248
        %v261 = vpack.c.bf16 %v253, %v251
        %v262 = vpack.c.bf16 %v254, %v252
        %v263 = vld [vmem:[%s0] sm:$0xff]
        %v264 = vld [vmem:[%s0 + $0x8] sm:$0xff]
        %v265 = vld [vmem:[%s0 + $0x10] sm:$0xff]
        %v266 = vld [vmem:[%s0 + $0x18] sm:$0xff]
        %v267 = vpack.c.bf16 %v264, %v263
        %v268 = vpack.c.bf16 %v266, %v265
        %v269 = vld [vmem:[%s2] sm:$0xff]
        %v270 = vld [vmem:[%s2 + $0x8] sm:$0xff]
        %v271 = vld [vmem:[%s2 + $0x10] sm:$0xff]
        %v272 = vld [vmem:[%s2 + $0x18] sm:$0xff]
        %274 = vset.pattern.permute.xlu0 0
        %275 = vperm.xlu0 %274, %v269
        %v276 = vpop.permute.xlu0 %275
        %279 = vset.pattern.permute.xlu0 0
        %280 = vperm.xlu0 %279, %v270
        %v281 = vpop.permute.xlu0 %280
        %284 = vset.pattern.permute.xlu0 0
        %285 = vperm.xlu0 %284, %v271
        %v286 = vpop.permute.xlu0 %285
        %289 = vset.pattern.permute.xlu0 0
        %290 = vperm.xlu0 %289, %v272
        %v291 = vpop.permute.xlu0 %290
        %vm293 = vcmask 523264
        %v295 = vsel %vm293, %v267, 0
        %v298 = vsel %vm293, %v268, 0
        %300 = vmatpush.bf16.msra.mxu0 0
        %301 = vmatpush.bf16.msra.mxu0 0
        %302 = vmatpush.bf16.msra.mxu0 0
        %303 = vmatpush.bf16.msra.mxu0 0
        %304 = vmatpush.bf16.msra.mxu0 %v261
        %305 = vmatpush.bf16.msra.mxu0 %v259
        %306 = vmatpush.bf16.msra.mxu0 %v257
        %307 = vmatpush.bf16.msra.mxu0 %v255
        %308 = vmatmul.bf16.gmra.mxu0 %v295
        %v309 = vpop.f32.mrf.mxu0
        %v310 = vadd.f32 %v276, %v309
        %v311 = vpop.f32.mrf.mxu0
        %v312 = vadd.f32 %v281, %v311
        %313 = vmatmul.bf16.gmra.mxu0 %v298
        %v314 = vpop.f32.mrf.mxu0
        %v315 = vadd.f32 %v286, %v314
        %v316 = vpop.f32.mrf.mxu0
        %v317 = vadd.f32 %v291, %v316
        %318 = vdwg.mxu0
        %319 = vmatpush.bf16.msra.mxu0 0
        %320 = vmatpush.bf16.msra.mxu0 0
        %321 = vmatpush.bf16.msra.mxu0 0
        %322 = vmatpush.bf16.msra.mxu0 0
        %323 = vmatpush.bf16.msra.mxu0 %v262
        %324 = vmatpush.bf16.msra.mxu0 %v260
        %325 = vmatpush.bf16.msra.mxu0 %v258
        %326 = vmatpush.bf16.msra.mxu0 %v256
        %327 = vmatmul.bf16.gmra.mxu0 %v295
        %v328 = vpop.f32.mrf.mxu0
        %v329 = vadd.f32 %v276, %v328
        %v330 = vpop.f32.mrf.mxu0
        %v331 = vadd.f32 %v281, %v330
        %332 = vmatmul.bf16.gmra.mxu0 %v298
        %v333 = vpop.f32.mrf.mxu0
        %v334 = vadd.f32 %v286, %v333
        %v335 = vpop.f32.mrf.mxu0
        %v336 = vadd.f32 %v291, %v335
        %337 = vdwg.mxu0
        %v338 = vld [vmem:[%s3] sm:$0xff]
        %v339 = vld [vmem:[%s3 + $0x8] sm:$0xff]
        %v340 = vld [vmem:[%s3 + $0x10] sm:$0xff]
        %v341 = vld [vmem:[%s3 + $0x18] sm:$0xff]
        %vm342 = vcmp.ge.f32.partialorder %v310, 0.0
        %vm343 = vcmp.ge.f32.partialorder %v329, 0.0
        %vm344 = vcmp.ge.f32.partialorder %v312, 0.0
        %vm345 = vcmp.ge.f32.partialorder %v331, 0.0
        %vm346 = vcmp.ge.f32.partialorder %v315, 0.0
        %vm347 = vcmp.ge.f32.partialorder %v334, 0.0
        %vm348 = vcmp.ge.f32.partialorder %v317, 0.0
        %vm349 = vcmp.ge.f32.partialorder %v336, 0.0
        %351 = vset.pattern.permute.xlu0 0
        %352 = vperm.xlu0 %351, %v338
        %v353 = vpop.permute.xlu0 %352
        %356 = vset.pattern.permute.xlu0 0
        %357 = vperm.xlu0 %356, %v339
        %v358 = vpop.permute.xlu0 %357
        %361 = vset.pattern.permute.xlu0 0
        %362 = vperm.xlu0 %361, %v340
        %v363 = vpop.permute.xlu0 %362
        %366 = vset.pattern.permute.xlu0 0
        %367 = vperm.xlu0 %366, %v341
        %v368 = vpop.permute.xlu0 %367
        %v370 = vmul.f32 %v353, %v310
        %v371 = vmul.f32 %v353, %v329
        %v372 = vmul.f32 %v358, %v312
        %v373 = vmul.f32 %v358, %v331
        %v374 = vmul.f32 %v363, %v315
        %v375 = vmul.f32 %v363, %v334
        %v376 = vmul.f32 %v368, %v317
        %v377 = vmul.f32 %v368, %v336
        %v378 = vsel %vm342, %v310, %v370
        %v379 = vsel %vm343, %v329, %v371
        %v380 = vsel %vm344, %v312, %v372
        %v381 = vsel %vm345, %v331, %v373
        %v382 = vsel %vm346, %v315, %v374
        %v383 = vsel %vm347, %v334, %v375
        %v384 = vsel %vm348, %v317, %v376
        %v385 = vsel %vm349, %v336, %v377
        %v386 = vpack.c.bf16 %v379, %v378
        %v387 = vpack.c.bf16 %v381, %v380
        %v388 = vpack.c.bf16 %v383, %v382
        %v389 = vpack.c.bf16 %v385, %v384
        %390 = vst [vmem:[%s235] sm:$0xff] %v386
        %391 = vst [vmem:[%s235 + $0x8] sm:$0xff] %v387
        %392 = vst [vmem:[%s235 + $0x10] sm:$0xff] %v388
        %393 = vst [vmem:[%s235 + $0x18] sm:$0xff] %v389
        %s394 = sand.u32 %s134, 1
        %s395 = scalar_lea.sflag [#allocation4], %s394
        %s396 = sand.u32 %s134, 1
        %s397 = smul.addr %s396, 32
        %s398 = scalar_lea.vmem [#allocation5], %s397
        // Predicated region
        $region41: #{tpu_custom_call.1} parent=35 // pred_check
          %p399 = pneg %p144
        $region42: #{tpu_custom_call.1} parent=35 // pred_check_branch
          %401 = sbr.rel (%p399) target = $region44
        $region43: #{tpu_custom_call.1} parent=35 // pred_region
          %s402 = smul.u32 2, %s26
          %404 = vsyncadd %s395, 0
          %s405 = smul.addr %s25, 8
          %s406 = sadd.s32 %s402, %s405
          %s407 = smul.addr %s406, 4
          %s408 = scalar_lea.hbm %s4, %s407
          %s409 = sshll.u32 %s398, 4
          %s410 = int_to_ptr.vmem [resolvable:$true] %s409
          %s411 = sshll.u32 %s408, 4
          %s412 = int_to_ptr.hbm [resolvable:$true] %s411
          %417 = dma.vmem_to_hbm [thread:$0]  %s410, 512, %s412, %s395, 128, 128, 8
        $region44: #{tpu_custom_call.1} parent=35 // pred_fallthru
          _
      $region36: #{tpu_custom_call.1} parent=5 // pred_fallthru
        _
      %p418 = scmp.le.s32.totalorder 2, %s16
      // Predicated region
      $region45: #{tpu_custom_call.1} parent=5 // pred_check
        %p419 = pneg %p418
      $region46: #{tpu_custom_call.1} parent=5 // pred_check_branch
        %421 = sbr.rel (%p419) target = $region48
      $region47: #{tpu_custom_call.1} parent=5 // pred_region
        %s422 = ssub.s32 %s16, 2
        // Predicated region
        $region49: #{tpu_custom_call.1} parent=47 // pred_check
          %p423 = pneg %p150
        $region50: #{tpu_custom_call.1} parent=47 // pred_check_branch
          %425 = sbr.rel (%p423) target = $region52
        $region51: #{tpu_custom_call.1} parent=47 // pred_region
          %s426 = sand.u32 %s135, 1
          %s427 = scalar_lea.sflag [#allocation4], %s426
          %s428 = sand.u32 %s135, 1
          %s429 = smul.addr %s428, 32
          %s430 = scalar_lea.vmem [#allocation5], %s429
          %432 = dma.done %s427, 512
        $region52: #{tpu_custom_call.1} parent=47 // pred_fallthru
          _
      $region48: #{tpu_custom_call.1} parent=5 // pred_fallthru
        _
    $region6: #{tpu_custom_call.1} parent=1 // loop_footer
      %s20 = sadd.s32 1, %s16
    $region7: #{tpu_custom_call.1} parent=1 // loop_footer_branch
      %15 = sbr.rel target = $region3
    $region8: #{tpu_custom_call.1} parent=1 // loop_exit
      _
    %433 = vsyncpa [#allocation3], 1
    %s434 = scalar_lea.sflag [#allocation3], 1
    %435 = vsyncpa %s434, 1
    %436 = vsyncpa [#allocation4], 1
    %s437 = scalar_lea.sflag [#allocation4], 1
    %438 = vsyncpa %s437, 1

</llo_original>
